<compile_context>
chip_gen: v7x
topology: tpu7x:2x2x1
jax: 0.10.0
libtpu: 0.0.40
codegen_flags: <defaults>
</compile_context>

<pallas_src>
import jax
import jax.numpy as jnp
from jax.experimental import pallas as pl
from jax.experimental.pallas import tpu as pltpu


def _vmem_capacity_bytes() -> int:
    try:
        cap = getattr(pltpu.get_tpu_info(), "vmem_capacity_bytes", None)
        if cap:
            return int(cap)
    except Exception:
        pass
    return 64 * 1024 * 1024        # conservative default (v7x: 64 MiB / TC)


def _num_tensorcores() -> int:
    # Dual-TensorCore chips (megacore v4/v5p, and v7x). Heuristic only:
    # getting it wrong costs performance, never correctness.
    try:
        kind = jax.devices()[0].device_kind.lower()
    except Exception:
        return 1
    if ("v4" in kind) or ("v5p" in kind) or ("7" in kind):
        return 2
    return 1


def _make_kernel(*, has_mask, mw, eps, log_input, L, R_valid, tm, steps_per_part):
    inv_L = 1.0 / float(L)

    def kernel(*refs):
        if has_mask:
            x_ref, t_ref, m_ref, o_ref, acc_ref = refs
        else:
            x_ref, t_ref, o_ref, acc_ref = refs
        p = pl.program_id(0)
        i = pl.program_id(1)

        @pl.when(i == 0)
        def _():
            acc_ref[...] = jnp.zeros_like(acc_ref)

        # Inputs stream in their HBM dtype (f32 or bf16); math is f32 in-kernel.
        x = x_ref[...].astype(jnp.float32)            # (tm, L)
        t = t_ref[...].astype(jnp.float32)            # (tm, L)
        inp = jnp.exp(x) if log_input else x + eps
        if has_mask:
            m = m_ref[...].astype(jnp.float32)
            inp = inp * m
            t = t * m

        total_in = jnp.sum(inp, axis=-1, keepdims=True) + eps     # (tm, 1)
        total_tg = jnp.sum(t, axis=-1, keepdims=True) + eps       # (tm, 1)

        # F.poisson_nll_loss(log_input=False): in - tg*log(in + 1e-8), then /= L.
        poisson = (total_in - total_tg * jnp.log(total_in + 1e-8)) * inv_L

        # log(inp/total_in + eps) == log(inp + eps*total_in) - log(total_in)
        # (per-element divide eliminated; second log is per-row only).
        # Do NOT fold log(total_in) into log(total_in + 1e-8): they differ for
        # fully-masked rows where total_in ~= eps.
        log_p = jnp.log(inp + eps * total_in) - jnp.log(total_in)   # (tm, L)
        mult = -jnp.sum(t * log_p, axis=-1, keepdims=True) * inv_L  # (tm, 1)

        per_row = mw * mult + poisson                                # (tm, 1)

        # Mask rows beyond R_valid (partial tail tile / clamped overflow steps).
        # jnp.where is a true select, so garbage rows can't propagate NaN/Inf.
        row_start = (p * steps_per_part + i) * tm
        rows = jax.lax.broadcasted_iota(jnp.int32, (tm, 1), 0) + row_start
        # Per-row vector accumulator: plain VPU add each step (no per-step
        # cross-sublane reduce, no single-scalar RMW dependency chain).
        acc_ref[...] += jnp.where(rows < R_valid, per_row, 0.0)

        @pl.when(i == pl.num_programs(1) - 1)
        def _():
            o_ref[...] = jnp.broadcast_to(
                jnp.sum(acc_ref[...], keepdims=True), o_ref.shape)

    return kernel


def poisson_multinomial_loss(inputs, target, mask=None, *,
                             multinomial_weight: float = 5.0,
                             mse_weight: float = 1.0,  # does not affect the returned value
                             eps: float = 1e-7,
                             log_input: bool = False,
                             tm=None):
    """Scalar loss matching PoissonMultinomialLoss.forward (axis='length').

    Inputs/targets may be float32 or bfloat16 (bf16 halves the HBM traffic of
    this bandwidth-bound kernel); all math is done in float32 in-kernel.
    """
    B, T, L = inputs.shape
    R = B * T                       # logical rows, each reduced over L

    x = inputs.reshape(R, L)
    t = target.reshape(R, L)
    has_mask = mask is not None
    m = None
    if has_mask:
        m = mask.reshape(R, L)
        if m.dtype == jnp.bool_:
            # TODO(synk): stream the bool buffer directly once bool VMEM refs are
            # universally supported; numeric masks already stream with zero cost.
            m = m.astype(jnp.uint8)

    # Tiny-row safety: pad up to one sublane group (padded rows masked in-kernel).
    if R < 8:
        pad = 8 - R
        x = jnp.pad(x, ((0, pad), (0, 0)))
        t = jnp.pad(t, ((0, pad), (0, 0)))
        if has_mask:
            m = jnp.pad(m, ((0, pad), (0, 0)))
    R_rows = x.shape[0]

    operands = [x, t] + ([m] if has_mask else [])

    # --- Row-tile sizing ------------------------------------------------------
    # Budget both the double-buffered HBM-dtype DMA tiles AND the ~5-6 f32
    # (tm, L) temporaries the kernel materializes; capacity queried per device.
    vmem_cap = _vmem_capacity_bytes()
    stream_bytes_per_row = L * sum(a.dtype.itemsize for a in operands)
    temp_bytes_per_row = 6 * L * 4
    per_row_cost = 2 * stream_bytes_per_row + temp_bytes_per_row
    if tm is None:
        tm = (vmem_cap // 4) // per_row_cost
    tm = int(max(8, min(int(tm), 1024)))
    tm = (tm // 8) * 8
    tm = min(tm, ((R_rows + 7) // 8) * 8)
    # TODO(synk): add an L-tiled two-pass fallback for L so large that even a
    # (8, L) f32 working set exceeds the VMEM budget (L is never tiled here).

    num_steps = (R_rows + tm - 1) // tm

    # Split the row loop across TensorCores only on dual-TC chips, and only when
    # it doesn't create a redundant clamped step's worth of extra DMA traffic.
    n_tc = _num_tensorcores()
    n_parts = 1
    if n_tc > 1 and num_steps >= 2 and (num_steps % n_tc == 0 or num_steps >= 8):
        n_parts = n_tc
    steps_per_part = -(-num_steps // n_parts)

    def in_map(p, i):
        # Clamp overflow steps of the last partition to a valid block; their
        # contribution is zeroed in-kernel by the row-validity mask.
        return (jnp.minimum(p * steps_per_part + i, num_steps - 1), 0)

    kernel = _make_kernel(
        has_mask=has_mask, mw=float(multinomial_weight), eps=float(eps),
        log_input=bool(log_input), L=int(L), R_valid=int(R), tm=int(tm),
        steps_per_part=int(steps_per_part))

    n_elem = R * L
    cost = pl.CostEstimate(
        flops=int(8 * n_elem),
        transcendentals=int(n_elem * (2 if log_input else 1) + 2 * R),
        bytes_accessed=int(sum(a.size * a.dtype.itemsize for a in operands)
                           + n_parts * 8 * 128 * 4))

    vmem_limit = int(max(32 * 1024 * 1024,
                         min(vmem_cap - 16 * 1024 * 1024, 100 * 1024 * 1024)))

    partials = pl.pallas_call(
        kernel,
        out_shape=jax.ShapeDtypeStruct((n_parts * 8, 128), jnp.float32),
        grid_spec=pltpu.PrefetchScalarGridSpec(
            num_scalar_prefetch=0,
            grid=(n_parts, steps_per_part),
            in_specs=[pl.BlockSpec((tm, L), in_map) for _ in operands],
            out_specs=pl.BlockSpec((8, 128), lambda p, i: (p, 0)),
            scratch_shapes=[pltpu.VMEM((tm, 1), jnp.float32)],
        ),
        compiler_params=pltpu.CompilerParams(
            # TODO(synk): verify in a profile that the leading "parallel" axis is
            # actually sharded across both v7x TensorCores; if not, switch it to
            # pltpu.CORE_PARALLEL.
            dimension_semantics=("parallel", "arbitrary"),
            vmem_limit_bytes=vmem_limit),
        cost_estimate=cost,
    )(*operands)

    total = partials.reshape(n_parts, 8, 128)[:, 0, 0].sum()
    # Both per-row terms are averaged over the same B*T rows.
    return (total / R).astype(jnp.float32)


def _reference_loss(inputs, target, mask=None, *, mw=5.0, eps=1e-7,
                    log_input=False):
    x = inputs.astype(jnp.float32)
    t = target.astype(jnp.float32)
    inp = jnp.exp(x) if log_input else x + eps
    if mask is not None:
        mk = mask.astype(jnp.float32)
        inp = inp * mk
        t = t * mk
    total_in = inp.sum(axis=2, keepdims=True) + eps
    total_tg = t.sum(axis=2, keepdims=True) + eps
    pois = (total_in - total_tg * jnp.log(total_in + 1e-8)) / x.shape[2]
    logp = jnp.log(inp / total_in + eps)
    mult = -(t * logp).mean(axis=2, keepdims=True)
    return mw * mult.mean() + pois.mean()


if __name__ == "__main__":
    key = jax.random.PRNGKey(0)
    ks = jax.random.split(key, 8)

    # 1) Primary small shape (B, T, L), no mask, f32.
    B, T, L = 2, 8, 128
    inputs = jax.random.uniform(ks[0], (B, T, L), jnp.float32, 0.0, 2.0)
    target = jax.random.uniform(ks[1], (B, T, L), jnp.float32, 0.0, 3.0)
    out = jax.block_until_ready(poisson_multinomial_loss(inputs, target))
    ref = _reference_loss(inputs, target)
    assert jnp.allclose(out, ref, rtol=1e-5, atol=1e-5), (out, ref)

    # 2) Masked path (numeric mask streams with no extra cast pass).
    mask = (jax.random.uniform(ks[2], (B, T, L)) > 0.2).astype(jnp.float32)
    out_m = jax.block_until_ready(poisson_multinomial_loss(inputs, target, mask))
    ref_m = _reference_loss(inputs, target, mask)
    assert jnp.allclose(out_m, ref_m, rtol=1e-5, atol=1e-5), (out_m, ref_m)

    # 3) Partial tail tile (R % tm != 0) + forced small tile + log_input=True:
    #    exercises the row-validity select, the partition split (on dual-TC
    #    chips) and the exp path.
    B2, T2, L2 = 3, 50, 128
    inputs2 = jax.random.uniform(ks[3], (B2, T2, L2), jnp.float32, -1.0, 1.0)
    target2 = jax.random.uniform(ks[4], (B2, T2, L2), jnp.float32, 0.0, 3.0)
    out2 = jax.block_until_ready(
        poisson_multinomial_loss(inputs2, target2, tm=64, log_input=True))
    ref2 = _reference_loss(inputs2, target2, log_input=True)
    assert jnp.allclose(out2, ref2, rtol=1e-5, atol=1e-5), (out2, ref2)

    # 4) bf16 inputs (half the HBM bytes of the two dominant streams).
    B3, T3, L3 = 2, 16, 256
    x3 = jax.random.uniform(ks[5], (B3, T3, L3), jnp.float32, 0.0, 2.0).astype(jnp.bfloat16)
    t3 = jax.random.uniform(ks[6], (B3, T3, L3), jnp.float32, 0.0, 3.0).astype(jnp.bfloat16)
    out3 = jax.block_until_ready(poisson_multinomial_loss(x3, t3))
    ref3 = _reference_loss(x3.astype(jnp.float32), t3.astype(jnp.float32))
    assert jnp.allclose(out3, ref3, rtol=1e-4, atol=1e-4), (out3, ref3)

    # 5) Fewer rows than one sublane group (R < 8): exercises the padding path.
    B4, T4, L4 = 1, 4, 128
    x4 = jax.random.uniform(ks[7], (B4, T4, L4), jnp.float32, 0.0, 2.0)
    t4 = jax.random.uniform(ks[0], (B4, T4, L4), jnp.float32, 0.0, 3.0)
    out4 = jax.block_until_ready(poisson_multinomial_loss(x4, t4))
    ref4 = _reference_loss(x4, t4)
    assert jnp.allclose(out4, ref4, rtol=1e-5, atol=1e-5), (out4, ref4)

    print("KERNEL_OK")
</pallas_src>

<mosaic_0001>
module attributes {stable_mosaic.version = 11 : i64} {
  func.func @kernel(%arg0: i32, %arg1: i32, %arg2: memref<16x128xf32, #tpu.memory_space<vmem>>, %arg3: memref<16x128xf32, #tpu.memory_space<vmem>>, %arg4: memref<8x128xf32, #tpu.memory_space<vmem>>, %arg5: memref<16x1xf32, #tpu.memory_space<vmem>>) attributes {dimension_semantics = [#tpu.dimension_semantics<parallel>, #tpu.dimension_semantics<arbitrary>], iteration_bounds = array<i64: 1, 1>, scalar_prefetch = 0 : i64, scratch_operands = 1 : i64, tpu.core_type = #tpu.core_type<tc>, window_params = [{transform_indices = @transform_0, window_bounds = array<i64: 16, 128>}, {transform_indices = @transform_1, window_bounds = array<i64: 16, 128>}, {transform_indices = @transform_2, window_bounds = array<i64: 8, 128>}]} {
    %c0_i32 = arith.constant 0 : i32
    %0 = arith.cmpi eq, %arg1, %c0_i32 : i32
    %1 = arith.extui %0 : i1 to i32
    %c0_i32_0 = arith.constant 0 : i32
    %2 = arith.cmpi ne, %1, %c0_i32_0 : i32
    scf.if %2 {
      %cst_23 = arith.constant 0.000000e+00 : f32
      %56 = vector.broadcast %cst_23 : f32 to vector<16x1xf32>
      %c0_24 = arith.constant 0 : index
      %c0_25 = arith.constant 0 : index
      %57 = vector.load %arg5[%c0_24, %c0_25] : memref<16x1xf32, #tpu.memory_space<vmem>>, vector<16x1xf32>
      tpu.vector_store %arg5[%c0_24, %c0_25], %56 {strides = array<i32>} : memref<16x1xf32, #tpu.memory_space<vmem>>, vector<16x1xf32>,
    } else {
    }
    %c0 = arith.constant 0 : index
    %c0_1 = arith.constant 0 : index
    %3 = vector.load %arg2[%c0, %c0_1] : memref<16x128xf32, #tpu.memory_space<vmem>>, vector<16x128xf32>
    %c0_2 = arith.constant 0 : index
    %c0_3 = arith.constant 0 : index
    %4 = vector.load %arg3[%c0_2, %c0_3] : memref<16x128xf32, #tpu.memory_space<vmem>>, vector<16x128xf32>
    %cst = arith.constant 1.000000e-07 : f32
    %5 = vector.broadcast %cst : f32 to vector<16x128xf32>
    %6 = arith.addf %3, %5 : vector<16x128xf32>
    %cst_4 = arith.constant dense<0.000000e+00> : vector<16xf32>
    %7 = vector.multi_reduction <add>, %6, %cst_4 [1] : vector<16x128xf32> to vector<16xf32>
    %8 = vector.shape_cast %7 : vector<16xf32> to vector<16x1xf32>
    %cst_5 = arith.constant 1.000000e-07 : f32
    %9 = vector.broadcast %cst_5 : f32 to vector<16x1xf32>
    %10 = arith.addf %8, %9 : vector<16x1xf32>
    %cst_6 = arith.constant dense<0.000000e+00> : vector<16xf32>
    %11 = vector.multi_reduction <add>, %4, %cst_6 [1] : vector<16x128xf32> to vector<16xf32>
    %12 = vector.shape_cast %11 : vector<16xf32> to vector<16x1xf32>
    %cst_7 = arith.constant 1.000000e-07 : f32
    %13 = vector.broadcast %cst_7 : f32 to vector<16x1xf32>
    %14 = arith.addf %12, %13 : vector<16x1xf32>
    %cst_8 = arith.constant 9.99999993E-9 : f32
    %15 = vector.broadcast %cst_8 : f32 to vector<16x1xf32>
    %16 = arith.addf %10, %15 : vector<16x1xf32>
    %17 = math.log %16 : vector<16x1xf32>
    %18 = arith.mulf %14, %17 : vector<16x1xf32>
    %19 = arith.subf %10, %18 : vector<16x1xf32>
    %cst_9 = arith.constant 7.812500e-03 : f32
    %20 = vector.broadcast %cst_9 : f32 to vector<16x1xf32>
    %21 = arith.mulf %19, %20 : vector<16x1xf32>
    %cst_10 = arith.constant 1.000000e-07 : f32
    %22 = vector.broadcast %cst_10 : f32 to vector<16x1xf32>
    %23 = arith.mulf %22, %10 : vector<16x1xf32>
    %24 = vector.broadcast %23 : vector<16x1xf32> to vector<16x128xf32>
    %25 = arith.addf %6, %24 : vector<16x128xf32>
    %26 = math.log %25 : vector<16x128xf32>
    %27 = math.log %10 : vector<16x1xf32>
    %28 = vector.broadcast %27 : vector<16x1xf32> to vector<16x128xf32>
    %29 = arith.subf %26, %28 : vector<16x128xf32>
    %30 = arith.mulf %4, %29 : vector<16x128xf32>
    %cst_11 = arith.constant dense<0.000000e+00> : vector<16xf32>
    %31 = vector.multi_reduction <add>, %30, %cst_11 [1] : vector<16x128xf32> to vector<16xf32>
    %32 = vector.shape_cast %31 : vector<16xf32> to vector<16x1xf32>
    %cst_12 = arith.constant 0.000000e+00 : f32
    %33 = vector.broadcast %cst_12 : f32 to vector<16x1xf32>
    %34 = arith.subf %33, %32 : vector<16x1xf32>
    %cst_13 = arith.constant 7.812500e-03 : f32
    %35 = vector.broadcast %cst_13 : f32 to vector<16x1xf32>
    %36 = arith.mulf %34, %35 : vector<16x1xf32>
    %cst_14 = arith.constant 5.000000e+00 : f32
    %37 = vector.broadcast %cst_14 : f32 to vector<16x1xf32>
    %38 = arith.mulf %37, %36 : vector<16x1xf32>
    %39 = arith.addf %38, %21 : vector<16x1xf32>
    %c1_i32 = arith.constant 1 : i32
    %40 = arith.muli %arg0, %c1_i32 : i32
    %41 = arith.addi %40, %arg1 : i32
    %c16_i32 = arith.constant 16 : i32
    %42 = arith.muli %41, %c16_i32 : i32
    %43 = tpu.iota {dimensions = array<i32: 0>} : vector<16x1xi32>
    %44 = vector.broadcast %42 : i32 to vector<16x1xi32>
    %45 = arith.addi %43, %44 : vector<16x1xi32>
    %c0_15 = arith.constant 0 : index
    %c0_16 = arith.constant 0 : index
    %46 = vector.load %arg5[%c0_15, %c0_16] : memref<16x1xf32, #tpu.memory_space<vmem>>, vector<16x1xf32>
    %c16_i32_17 = arith.constant 16 : i32
    %47 = vector.broadcast %c16_i32_17 : i32 to vector<16x1xi32>
    %48 = arith.cmpi slt, %45, %47 : vector<16x1xi32>
    %cst_18 = arith.constant 0.000000e+00 : f32
    %49 = vector.broadcast %cst_18 : f32 to vector<16x1xf32>
    %50 = arith.select %48, %39, %49 : vector<16x1xi1>, vector<16x1xf32>
    %51 = arith.addf %46, %50 : vector<16x1xf32>
    %c0_19 = arith.constant 0 : index
    %c0_20 = arith.constant 0 : index
    %52 = vector.load %arg5[%c0_19, %c0_20] : memref<16x1xf32, #tpu.memory_space<vmem>>, vector<16x1xf32>
    tpu.vector_store %arg5[%c0_19, %c0_20], %51 {strides = array<i32>} : memref<16x1xf32, #tpu.memory_space<vmem>>, vector<16x1xf32>,
    %c0_i32_21 = arith.constant 0 : i32
    %53 = arith.cmpi eq, %arg1, %c0_i32_21 : i32
    %54 = arith.extui %53 : i1 to i32
    %c0_i32_22 = arith.constant 0 : i32
    %55 = arith.cmpi ne, %54, %c0_i32_22 : i32
    scf.if %55 {
      %c0_23 = arith.constant 0 : index
      %c0_24 = arith.constant 0 : index
      %56 = vector.load %arg5[%c0_23, %c0_24] : memref<16x1xf32, #tpu.memory_space<vmem>>, vector<16x1xf32>
      %57 = vector.shape_cast %56 : vector<16x1xf32> to vector<1x16x1xf32>
      %cst_25 = arith.constant dense<0.000000e+00> : vector<1xf32>
      %58 = vector.multi_reduction <add>, %57, %cst_25 [1, 2] : vector<1x16x1xf32> to vector<1xf32>
      %59 = vector.shape_cast %58 : vector<1xf32> to vector<1x1x1xf32>
      %60 = vector.extract %59[0, 0, 0] : f32 from vector<1x1x1xf32>
      %61 = vector.broadcast %60 : f32 to vector<1x1xf32>
      %62 = vector.shape_cast %61 : vector<1x1xf32> to vector<1x1xf32>
      %63 = vector.broadcast %62 : vector<1x1xf32> to vector<8x128xf32>
      %c0_26 = arith.constant 0 : index
      %c0_27 = arith.constant 0 : index
      %64 = vector.load %arg4[%c0_26, %c0_27] : memref<8x128xf32, #tpu.memory_space<vmem>>, vector<8x128xf32>
      tpu.vector_store %arg4[%c0_26, %c0_27], %63 {strides = array<i32>} : memref<8x128xf32, #tpu.memory_space<vmem>>, vector<8x128xf32>,
    } else {
    }
    return
  }
  func.func @transform_0(%arg0: i32, %arg1: i32) -> (i32, i32) {
    %c1_i32 = arith.constant 1 : i32
    %0 = arith.muli %arg0, %c1_i32 : i32
    %1 = arith.addi %0, %arg1 : i32
    %c0_i32 = arith.constant 0 : i32
    %2 = arith.minsi %1, %c0_i32 : i32
    %c0_i32_0 = arith.constant 0 : i32
    %c0_i32_1 = arith.constant 0 : i32
    return %2, %c0_i32_0 : i32, i32
  }
  func.func @transform_1(%arg0: i32, %arg1: i32) -> (i32, i32) {
    %c1_i32 = arith.constant 1 : i32
    %0 = arith.muli %arg0, %c1_i32 : i32
    %1 = arith.addi %0, %arg1 : i32
    %c0_i32 = arith.constant 0 : i32
    %2 = arith.minsi %1, %c0_i32 : i32
    %c0_i32_0 = arith.constant 0 : i32
    %c0_i32_1 = arith.constant 0 : i32
    return %2, %c0_i32_0 : i32, i32
  }
  func.func @transform_2(%arg0: i32, %arg1: i32) -> (i32, i32) {
    %c0_i32 = arith.constant 0 : i32
    %c0_i32_0 = arith.constant 0 : i32
    return %arg0, %c0_i32 : i32, i32
  }
}

</mosaic_0001>

<llo_original>
// kernel: tpu_custom_call.1
$region0: #{tpu_custom_call.1}
  #allocation0 [shape = 'u32[]', space=smem, size = 0x4, offset = 0x4, fixed_abs, tag = 'smem constant byte address 0x4 - core index']
  #allocation1 [shape = 'u32[144,128]{1,0:T(1,128)}', space=vmem, size = 0x12000, scoped, tag = 'internal scratch']
  #allocation2 [shape = 'f32[16,1]{1,0:T(8,128)}', space=vmem, size = 0x2000, scoped, tag = 'scratch operand']
  %s0 = inlined_call_operand.hbm [shape: f32[16,128], index: 0, kind: input, shape index: {}]
  %s1 = inlined_call_operand.hbm [shape: f32[16,128], index: 1, kind: input, shape index: {}]
  %s2 = inlined_call_operand.hbm [shape: f32[8,128], index: 2, kind: output, shape index: {}]
  %s3 = sld [smem:[#allocation0]]
  $region34: #{tpu_custom_call.1} parent=0
    _
  %s5 = ssub.s32 1, %s3
  %s6 = scalar_select 0, %s5, %s3
  $region1: #{tpu_custom_call.1} parent=0
    #allocation3 [shape = 'u8[8192]{0}', space=vmem, size = 0x2000, scoped, tag = 'input window, operand 0, single buffered']
    #allocation4 [shape = 's32[1]{0}', space=sflag, size = 0x4, scoped, tag = 'scoped memory for tpu_custom_call.1']
    #allocation5 [shape = 's32[1]{0}', space=sflag, size = 0x4, scoped, tag = 'scoped memory for tpu_custom_call.1']
    #allocation6 [shape = 'u8[8192]{0}', space=vmem, size = 0x2000, scoped, tag = 'input window, operand 1, single buffered']
    #allocation7 [shape = 's32[1]{0}', space=sflag, size = 0x4, scoped, tag = 'scoped memory for tpu_custom_call.1']
    #allocation8 [shape = 'u8[4096]{0}', space=vmem, size = 0x1000, scoped, tag = 'output window, operand 0, single buffered']
    %7 = vsyncpa [#allocation4], 0
    %8 = vsyncpa [#allocation7], 0
    %9 = vsyncpa [#allocation5], 0
    // Predicated region
    $region2: #{tpu_custom_call.1} parent=1 // pred_check
      _
    $region3: #{tpu_custom_call.1} parent=1 // pred_check_branch
      %11 = sbr.rel (0) target = $region5
    $region4: #{tpu_custom_call.1} parent=1 // pred_region
      %s12 = sadd.s32 0, 0
      %p13 = scmp.lt.s32.totalorder %s12, 0
      %s14 = scalar_select %p13, %s12, 0
      %s15 = smul.u32 2, %s14
      %s17 = ssub.s32 256, 256
      %18 = vsyncadd [#allocation4], %s17
      %s19 = smul.addr %s15, 128
      %s20 = scalar_lea.hbm %s0, %s19
      %s21 = sshll.u32 [#allocation3], 4
      %s22 = int_to_ptr.vmem [resolvable:$true] %s21
      %27 = dma.hbm_to_vmem [thread:$0]  %s20, 256, %s22, [#allocation4], 128, 128, 8
    $region5: #{tpu_custom_call.1} parent=1 // pred_fallthru
      _
    // Predicated region
    $region6: #{tpu_custom_call.1} parent=1 // pred_check
      _
    $region7: #{tpu_custom_call.1} parent=1 // pred_check_branch
      %29 = sbr.rel (0) target = $region9
    $region8: #{tpu_custom_call.1} parent=1 // pred_region
      %s30 = sadd.s32 0, 0
      %p31 = scmp.lt.s32.totalorder %s30, 0
      %s32 = scalar_select %p31, %s30, 0
      %s33 = smul.u32 2, %s32
      %s35 = ssub.s32 256, 256
      %36 = vsyncadd [#allocation7], %s35
      %s37 = smul.addr %s33, 128
      %s38 = scalar_lea.hbm %s1, %s37
      %s39 = sshll.u32 [#allocation6], 4
      %s40 = int_to_ptr.vmem [resolvable:$true] %s39
      %45 = dma.hbm_to_vmem [thread:$0]  %s38, 256, %s40, [#allocation7], 128, 128, 8
    $region9: #{tpu_custom_call.1} parent=1 // pred_fallthru
      _
    // Predicated region
    $region10: #{tpu_custom_call.1} parent=1 // pred_check
      _
    $region11: #{tpu_custom_call.1} parent=1 // pred_check_branch
      %47 = sbr.rel (0) target = $region13
    $region12: #{tpu_custom_call.1} parent=1 // pred_region
      %48 = dma.done [#allocation4], 256
    $region13: #{tpu_custom_call.1} parent=1 // pred_fallthru
      _
    // Predicated region
    $region14: #{tpu_custom_call.1} parent=1 // pred_check
      _
    $region15: #{tpu_custom_call.1} parent=1 // pred_check_branch
      %50 = sbr.rel (0) target = $region17
    $region16: #{tpu_custom_call.1} parent=1 // pred_region
      %51 = dma.done [#allocation7], 256
    $region17: #{tpu_custom_call.1} parent=1 // pred_fallthru
      _
    %s52 = sadd.s32 0, 0
    %p53 = scmp.lt.s32.totalorder %s52, 0
    %s54 = scalar_select %p53, %s52, 0
    %s55 = smul.u32 2, %s54
    %s56 = sadd.s32 0, 0
    %p57 = scmp.lt.s32.totalorder %s56, 0
    %s58 = scalar_select %p57, %s56, 0
    %s59 = smul.u32 2, %s58
    %p60 = scmp.eq.s32.totalorder 0, 0
    // Predicated region
    $region18: #{tpu_custom_call.1} parent=1 // pred_check
      %p61 = pneg %p60
    $region19: #{tpu_custom_call.1} parent=1 // pred_check_branch
      %63 = sbr.rel (%p61) target = $region21
    $region20: #{tpu_custom_call.1} parent=1 // pred_region
      %vm64 = vcmask 7168
      %65 = vst.msk [vmem:[#allocation2] sm:$0xff] %vm64, 0.0
      %66 = vst.msk [vmem:[#allocation2 + $0x8] sm:$0xff] %vm64, 0.0
    $region21: #{tpu_custom_call.1} parent=1 // pred_fallthru
      _
    %v67 = vld [vmem:[#allocation3] sm:$0xff]
    %v68 = vld [vmem:[#allocation3 + $0x8] sm:$0xff]
    %v69 = vld [vmem:[#allocation6] sm:$0xff]
    %v70 = vld [vmem:[#allocation6 + $0x8] sm:$0xff]
    %v71 = vadd.f32 %v67, 1e-07
    %v72 = vadd.f32 %v68, 1e-07
    %73 = vadd.xlane.f32.xlu0 %v71
    %v74 = vpop.xlane.xlu0 %73
    %75 = vadd.xlane.f32.xlu0 %v72
    %v76 = vpop.xlane.xlu0 %75
    %v77 = vadd.f32 %v74, 1e-07
    %v78 = vadd.f32 %v76, 1e-07
    %79 = vadd.xlane.f32.xlu0 %v69
    %v80 = vpop.xlane.xlu0 %79
    %81 = vadd.xlane.f32.xlu0 %v70
    %v82 = vpop.xlane.xlu0 %81
    %v83 = vadd.f32 %v80, 1e-07
    %v84 = vadd.f32 %v82, 1e-07
    %v85 = vadd.f32 %v77, 1e-08
    %v86 = vadd.f32 %v78, 1e-08
    %v87 = vlog2.pop %v85
    %v88 = vmul.f32 %v87, 0.6931472
    %v89 = vlog2.pop %v86
    %v90 = vmul.f32 %v89, 0.6931472
    %v91 = vmul.f32 %v83, %v88
    %v92 = vmul.f32 %v84, %v90
    %v93 = vsub.f32 %v77, %v91
    %v94 = vsub.f32 %v78, %v92
    %v95 = vmul.f32 %v93, 0.0078125
    %v96 = vmul.f32 %v94, 0.0078125
    %v97 = vmul.f32 %v77, 1e-07
    %v98 = vmul.f32 %v78, 1e-07
    %v99 = vadd.f32 %v71, %v97
    %v100 = vadd.f32 %v72, %v98
    %v101 = vlog2.pop %v99
    %v102 = vmul.f32 %v101, 0.6931472
    %v103 = vlog2.pop %v100
    %v104 = vmul.f32 %v103, 0.6931472
    %v105 = vlog2.pop %v77
    %v106 = vmul.f32 %v105, 0.6931472
    %v107 = vlog2.pop %v78
    %v108 = vmul.f32 %v107, 0.6931472
    %v109 = vsub.f32 %v102, %v106
    %v110 = vsub.f32 %v104, %v108
    %v111 = vmul.f32 %v69, %v109
    %v112 = vmul.f32 %v70, %v110
    %113 = vadd.xlane.f32.xlu0 %v111
    %v114 = vpop.xlane.xlu0 %113
    %115 = vadd.xlane.f32.xlu0 %v112
    %v116 = vpop.xlane.xlu0 %115
    %v117 = vsub.f32 0.0, %v114
    %v118 = vsub.f32 0.0, %v116
    %v119 = vmul.f32 %v117, 0.0078125
    %v120 = vmul.f32 %v118, 0.0078125
    %v121 = vmul.f32 %v119, 5.0
    %v122 = vmul.f32 %v120, 5.0
    %v123 = vadd.f32 %v121, %v95
    %v124 = vadd.f32 %v122, %v96
    %s125 = sadd.s32 0, 0
    %s126 = smul.u32 %s125, 16
    %v127 = vlaneseq
    %v128 = vshrl.u32 %v127, 7
    %v129 = vadd.s32 %v128, 8
    %v130 = vstv %s126
    %v131 = vadd.s32 %v128, %v130
    %v132 = vadd.s32 %v129, %v130
    %v133 = vld [vmem:[#allocation2] sm:$0xff]
    %v134 = vld [vmem:[#allocation2 + $0x8] sm:$0xff]
    %vm135 = vcmp.lt.s32.totalorder %v131, 16
    %vm136 = vcmp.lt.s32.totalorder %v132, 16
    %v137 = vsel %vm135, %v123, 0.0
    %v138 = vsel %vm136, %v124, 0.0
    %v139 = vadd.f32 %v133, %v137
    %v140 = vadd.f32 %v134, %v138
    %vm141 = vcmask 7168
    %142 = vst.msk [vmem:[#allocation2] sm:$0xff] %vm141, %v139
    %143 = vst.msk [vmem:[#allocation2 + $0x8] sm:$0xff] %vm141, %v140
    // Predicated region
    $region22: #{tpu_custom_call.1} parent=1 // pred_check
      %p144 = pneg %p60
    $region23: #{tpu_custom_call.1} parent=1 // pred_check_branch
      %146 = sbr.rel (%p144) target = $region25
    $region24: #{tpu_custom_call.1} parent=1 // pred_region
      %v147 = vld [vmem:[#allocation2] sm:$0xff]
      %v148 = vld [vmem:[#allocation2 + $0x8] sm:$0xff]
      %v149 = vsel %vm141, %v147, 0.0
      %v150 = vsel %vm141, %v148, 0.0
      %v151 = vadd.f32 %v149, %v150
      %152 = vadd.xlane.f32.xlu0 %v151
      %v153 = vpop.xlane.xlu0 %152
      %v154 = vrot.slane %v153, 4
      %v155 = vadd.f32 %v153, %v154
      %v156 = vrot.slane %v155, 2
      %v157 = vadd.f32 %v155, %v156
      %v158 = vrot.slane %v157, 1
      %v159 = vadd.f32 %v157, %v158
      %s160 = vtos %v159
      %v161 = vstv %s160
      %162 = vst [vmem:[#allocation8] sm:$0xff] %v161
    $region25: #{tpu_custom_call.1} parent=1 // pred_fallthru
      _
    // Predicated region
    $region26: #{tpu_custom_call.1} parent=1 // pred_check
      _
    $region27: #{tpu_custom_call.1} parent=1 // pred_check_branch
      %164 = sbr.rel (0) target = $region29
    $region28: #{tpu_custom_call.1} parent=1 // pred_region
      %s166 = ssub.s32 128, 128
      %167 = vsyncadd [#allocation5], %s166
      %s169 = sshll.u32 [#allocation8], 4
      %s170 = int_to_ptr.vmem [resolvable:$true] %s169
      %172 = dma.vmem_to_hbm [thread:$0]  %s170, 128, %s2, [#allocation5]
    $region29: #{tpu_custom_call.1} parent=1 // pred_fallthru
      _
    // Predicated region
    $region30: #{tpu_custom_call.1} parent=1 // pred_check
      _
    $region31: #{tpu_custom_call.1} parent=1 // pred_check_branch
      %174 = sbr.rel (0) target = $region33
    $region32: #{tpu_custom_call.1} parent=1 // pred_region
      %175 = dma.done [#allocation5], 128
    $region33: #{tpu_custom_call.1} parent=1 // pred_fallthru
      _
    %176 = vsyncpa [#allocation4], 1
    %177 = vsyncpa [#allocation7], 1
    %178 = vsyncpa [#allocation5], 1

</llo_original>
